<compile_context>
chip_gen: v7x
topology: tpu7x:2x2x1
jax: 0.10.0
libtpu: 0.0.40
codegen_flags: <defaults>
</compile_context>

<pallas_src>
import functools

import jax
import jax.numpy as jnp
import numpy as np
from jax.experimental import pallas as pl
from jax.experimental.pallas import tpu as pltpu


def _round_up(v, m):
    return (v + m - 1) // m * m


def _scale_residual_kernel(x_ref, w1_ref, b1_ref, a1_ref,
                           w2_ref, b2_ref, a2_ref, out_ref, *, valid_len):
    """Fused: Conv1d(k=3,p=1) -> PReLU -> Conv1d(k=3,p=1) -> PReLU -> +x."""
    B, Cp, Lp = x_ref.shape
    lane = jax.lax.broadcasted_iota(jnp.int32, (Cp, Lp), 1)

    # Hoist parameter loads out of the batch loop.
    w1 = w1_ref[...]                            # (Cp, 3*Cp), matmul dtype
    w2 = w2_ref[...]
    b1 = b1_ref[...].astype(jnp.float32)        # (Cp, 1)
    b2 = b2_ref[...].astype(jnp.float32)
    a1 = a1_ref[...].astype(jnp.float32)
    a2 = a2_ref[...].astype(jnp.float32)

    def conv_prelu(v, w, b, a):
        # v: (Cp, Lp). Taps via lane rotation (XLU slot) + boundary zeroing.
        left = jnp.where(lane == 0, jnp.zeros_like(v),
                         pltpu.roll(v, shift=1, axis=1))         # x[l-1]
        right = jnp.where(lane == Lp - 1, jnp.zeros_like(v),
                          pltpu.roll(v, shift=Lp - 1, axis=1))   # x[l+1]
        stacked = jnp.concatenate([left, v, right], axis=0)      # (3*Cp, Lp)
        y = jnp.dot(w, stacked, preferred_element_type=jnp.float32) + b
        return jnp.where(y > 0, y, a * y)                        # PReLU (f32)

    for bi in range(B):                         # static unroll over batch block
        xb = x_ref[bi]                          # (Cp, Lp)
        t = conv_prelu(xb, w1, b1, a1)
        if valid_len < Lp:
            # Zero the length padding so it acts as Conv1d zero padding for
            # the second conv.
            t = jnp.where(lane < valid_len, t, 0.0)
        t = conv_prelu(t.astype(w2.dtype), w2, b2, a2)
        out_ref[bi] = (t + xb.astype(jnp.float32)).astype(out_ref.dtype)


def _pack_weight(w, Cp):
    """(C_out, C_in, 3) -> (Cp, 3*Cp), columns grouped tap-major [l-1 | l | l+1]."""
    C_out, C_in, K = w.shape
    wp = jnp.zeros((Cp, Cp, K), w.dtype).at[:C_out, :C_in, :].set(w)
    return jnp.transpose(wp, (0, 2, 1)).reshape(Cp, K * Cp)


def _pad_channel_vec(v, Cp):
    return jnp.zeros((Cp, 1), v.dtype).at[:v.shape[0], 0].set(v)


def scale_residual_block(x, w1, b1, a1, w2, b2, a2, *, batch_block=None):
    """x: (N, C, L). wi: (C, C, 3) (PyTorch Conv1d layout), bi/ai: (C,).

    Works for f32 or bf16 x / weights (accumulation is always f32).
    """
    N, C, L = x.shape
    Cp = _round_up(C, 8)        # sublane alignment
    Lp = _round_up(L, 128)      # lane-dense blocks
    if batch_block is None:
        # Amortize the ~0.35us per-grid-step overhead, but keep >=2 grid
        # steps when possible so megacore sharding (v7x) can engage.
        batch_block = max(1, min(8, pl.cdiv(N, 2)))
    Np = _round_up(N, batch_block)

    x_p = jnp.pad(x, ((0, Np - N), (0, Cp - C), (0, Lp - L)))
    w1_p = _pack_weight(w1, Cp)
    w2_p = _pack_weight(w2, Cp)
    b1_p = _pad_channel_vec(b1, Cp)
    b2_p = _pad_channel_vec(b2, Cp)
    a1_p = _pad_channel_vec(a1, Cp)
    a2_p = _pad_channel_vec(a2, Cp)

    kernel = functools.partial(_scale_residual_kernel, valid_len=L)
    full2 = lambda shape: pl.BlockSpec(shape, lambda n: (0, 0))

    out_p = pl.pallas_call(
        kernel,
        out_shape=jax.ShapeDtypeStruct((Np, Cp, Lp), x.dtype),
        grid_spec=pltpu.PrefetchScalarGridSpec(
            num_scalar_prefetch=0,
            grid=(Np // batch_block,),
            in_specs=[
                pl.BlockSpec((batch_block, Cp, Lp), lambda n: (n, 0, 0)),  # x
                full2((Cp, 3 * Cp)),   # w1 packed
                full2((Cp, 1)),        # b1
                full2((Cp, 1)),        # a1
                full2((Cp, 3 * Cp)),   # w2 packed
                full2((Cp, 1)),        # b2
                full2((Cp, 1)),        # a2
            ],
            out_specs=pl.BlockSpec((batch_block, Cp, Lp), lambda n: (n, 0, 0)),
        ),
        compiler_params=pltpu.CompilerParams(
            dimension_semantics=("parallel",)),
    )(x_p, w1_p, b1_p, a1_p, w2_p, b2_p, a2_p)

    return out_p[:N, :C, :L]


def _reference(x, w1, b1, a1, w2, b2, a2):
    """Pure-JAX reference mirroring the PyTorch module."""
    def conv1d(inp, w, b):
        out = jax.lax.conv_general_dilated(
            inp, w, window_strides=(1,), padding=[(1, 1)],
            dimension_numbers=("NCH", "OIH", "NCH"))
        return out + b[None, :, None]

    def prelu(y, a):
        return jnp.where(y > 0, y, a[None, :, None] * y)

    t = prelu(conv1d(x, w1, b1), a1)
    t = prelu(conv1d(t, w2, b2), a2)
    return t + x


if __name__ == "__main__":
    N, C, L = 2, 8, 16
    key = jax.random.PRNGKey(0)
    kx, k1, k2, kb1, kb2 = jax.random.split(key, 5)

    x = jax.random.normal(kx, (N, C, L), dtype=jnp.float32)
    # Deterministic synthetic parameters (shapes match nn.Conv1d / nn.PReLU(channels)).
    w1 = jax.random.normal(k1, (C, C, 3), dtype=jnp.float32) * 0.1
    w2 = jax.random.normal(k2, (C, C, 3), dtype=jnp.float32) * 0.1
    b1 = jax.random.normal(kb1, (C,), dtype=jnp.float32) * 0.05
    b2 = jax.random.normal(kb2, (C,), dtype=jnp.float32) * 0.05
    a1 = jnp.full((C,), 0.25, dtype=jnp.float32)   # PReLU default init
    a2 = jnp.full((C,), 0.25, dtype=jnp.float32)

    out = scale_residual_block(x, w1, b1, a1, w2, b2, a2)
    out = jax.block_until_ready(out)

    ref = _reference(x, w1, b1, a1, w2, b2, a2)
    np.testing.assert_allclose(np.asarray(out), np.asarray(ref),
                               rtol=1e-5, atol=1e-5)
    print("KERNEL_OK")
</pallas_src>

<mosaic_0001>
module attributes {stable_mosaic.version = 11 : i64} {
  func.func @_scale_residual_kernel(%arg0: i32, %arg1: memref<1x8x128xf32, #tpu.memory_space<vmem>>, %arg2: memref<8x24xf32, #tpu.memory_space<vmem>>, %arg3: memref<8x1xf32, #tpu.memory_space<vmem>>, %arg4: memref<8x1xf32, #tpu.memory_space<vmem>>, %arg5: memref<8x24xf32, #tpu.memory_space<vmem>>, %arg6: memref<8x1xf32, #tpu.memory_space<vmem>>, %arg7: memref<8x1xf32, #tpu.memory_space<vmem>>, %arg8: memref<1x8x128xf32, #tpu.memory_space<vmem>>) attributes {dimension_semantics = [#tpu.dimension_semantics<parallel>], iteration_bounds = array<i64: 2>, scalar_prefetch = 0 : i64, scratch_operands = 0 : i64, tpu.core_type = #tpu.core_type<tc>, window_params = [{transform_indices = @transform_0, window_bounds = array<i64: 1, 8, 128>}, {pipeline_mode = #tpu.pipeline_mode<synchronous>, transform_indices = @transform_1, window_bounds = array<i64: 8, 24>}, {pipeline_mode = #tpu.pipeline_mode<synchronous>, transform_indices = @transform_2, window_bounds = array<i64: 8, 1>}, {pipeline_mode = #tpu.pipeline_mode<synchronous>, transform_indices = @transform_3, window_bounds = array<i64: 8, 1>}, {pipeline_mode = #tpu.pipeline_mode<synchronous>, transform_indices = @transform_4, window_bounds = array<i64: 8, 24>}, {pipeline_mode = #tpu.pipeline_mode<synchronous>, transform_indices = @transform_5, window_bounds = array<i64: 8, 1>}, {pipeline_mode = #tpu.pipeline_mode<synchronous>, transform_indices = @transform_6, window_bounds = array<i64: 8, 1>}, {transform_indices = @transform_7, window_bounds = array<i64: 1, 8, 128>}]} {
    %0 = tpu.iota {dimensions = array<i32: 1>} : vector<8x128xi32>
    %c0 = arith.constant 0 : index
    %c0_0 = arith.constant 0 : index
    %1 = vector.load %arg2[%c0, %c0_0] : memref<8x24xf32, #tpu.memory_space<vmem>>, vector<8x24xf32>
    %c0_1 = arith.constant 0 : index
    %c0_2 = arith.constant 0 : index
    %2 = vector.load %arg5[%c0_1, %c0_2] : memref<8x24xf32, #tpu.memory_space<vmem>>, vector<8x24xf32>
    %c0_3 = arith.constant 0 : index
    %c0_4 = arith.constant 0 : index
    %3 = vector.load %arg3[%c0_3, %c0_4] : memref<8x1xf32, #tpu.memory_space<vmem>>, vector<8x1xf32>
    %c0_5 = arith.constant 0 : index
    %c0_6 = arith.constant 0 : index
    %4 = vector.load %arg6[%c0_5, %c0_6] : memref<8x1xf32, #tpu.memory_space<vmem>>, vector<8x1xf32>
    %c0_7 = arith.constant 0 : index
    %c0_8 = arith.constant 0 : index
    %5 = vector.load %arg4[%c0_7, %c0_8] : memref<8x1xf32, #tpu.memory_space<vmem>>, vector<8x1xf32>
    %c0_9 = arith.constant 0 : index
    %c0_10 = arith.constant 0 : index
    %6 = vector.load %arg7[%c0_9, %c0_10] : memref<8x1xf32, #tpu.memory_space<vmem>>, vector<8x1xf32>
    %c0_11 = arith.constant 0 : index
    %c0_12 = arith.constant 0 : index
    %c0_13 = arith.constant 0 : index
    %7 = vector.load %arg1[%c0_11, %c0_12, %c0_13] : memref<1x8x128xf32, #tpu.memory_space<vmem>>, vector<1x8x128xf32>
    %8 = vector.shape_cast %7 : vector<1x8x128xf32> to vector<8x128xf32>
    %c0_i32 = arith.constant 0 : i32
    %9 = vector.broadcast %c0_i32 : i32 to vector<8x128xi32>
    %10 = arith.cmpi eq, %0, %9 : vector<8x128xi32>
    %cst = arith.constant 0.000000e+00 : f32
    %11 = vector.broadcast %cst : f32 to vector<8x128xf32>
    %c1_i32 = arith.constant 1 : i32
    %12 = tpu.dynamic_rotate %8 by %c1_i32 dim 1 : vector<8x128xf32>, i32 -> vector<8x128xf32>
    %13 = arith.select %10, %11, %12 : vector<8x128xi1>, vector<8x128xf32>
    %c127_i32 = arith.constant 127 : i32
    %14 = vector.broadcast %c127_i32 : i32 to vector<8x128xi32>
    %15 = arith.cmpi eq, %0, %14 : vector<8x128xi32>
    %cst_14 = arith.constant 0.000000e+00 : f32
    %16 = vector.broadcast %cst_14 : f32 to vector<8x128xf32>
    %c127_i32_15 = arith.constant 127 : i32
    %17 = tpu.dynamic_rotate %8 by %c127_i32_15 dim 1 : vector<8x128xf32>, i32 -> vector<8x128xf32>
    %18 = arith.select %15, %16, %17 : vector<8x128xi1>, vector<8x128xf32>
    %19 = tpu.concatenate %13, %8, %18 in 0 : vector<8x128xf32>, vector<8x128xf32>, vector<8x128xf32> -> vector<24x128xf32>
    %cst_16 = arith.constant dense<0.000000e+00> : vector<8x128xf32>
    %20 = tpu.matmul %1, %19, %cst_16 {dimension_numbers = #tpu.dot_dimension_numbers<[1], [0], [0], [1], [0, 0, 1, 1], [], []>} : vector<8x24xf32>, vector<24x128xf32>, vector<8x128xf32> -> vector<8x128xf32>
    %21 = vector.broadcast %3 : vector<8x1xf32> to vector<8x128xf32>
    %22 = arith.addf %20, %21 : vector<8x128xf32>
    %cst_17 = arith.constant 0.000000e+00 : f32
    %23 = vector.broadcast %cst_17 : f32 to vector<8x128xf32>
    %24 = arith.cmpf ogt, %22, %23 : vector<8x128xf32>
    %25 = vector.broadcast %5 : vector<8x1xf32> to vector<8x128xf32>
    %26 = arith.mulf %25, %22 : vector<8x128xf32>
    %27 = arith.select %24, %22, %26 : vector<8x128xi1>, vector<8x128xf32>
    %c16_i32 = arith.constant 16 : i32
    %28 = vector.broadcast %c16_i32 : i32 to vector<8x128xi32>
    %29 = arith.cmpi slt, %0, %28 : vector<8x128xi32>
    %cst_18 = arith.constant 0.000000e+00 : f32
    %30 = vector.broadcast %cst_18 : f32 to vector<8x128xf32>
    %31 = arith.select %29, %27, %30 : vector<8x128xi1>, vector<8x128xf32>
    %c0_i32_19 = arith.constant 0 : i32
    %32 = vector.broadcast %c0_i32_19 : i32 to vector<8x128xi32>
    %33 = arith.cmpi eq, %0, %32 : vector<8x128xi32>
    %cst_20 = arith.constant 0.000000e+00 : f32
    %34 = vector.broadcast %cst_20 : f32 to vector<8x128xf32>
    %c1_i32_21 = arith.constant 1 : i32
    %35 = tpu.dynamic_rotate %31 by %c1_i32_21 dim 1 : vector<8x128xf32>, i32 -> vector<8x128xf32>
    %36 = arith.select %33, %34, %35 : vector<8x128xi1>, vector<8x128xf32>
    %c127_i32_22 = arith.constant 127 : i32
    %37 = vector.broadcast %c127_i32_22 : i32 to vector<8x128xi32>
    %38 = arith.cmpi eq, %0, %37 : vector<8x128xi32>
    %cst_23 = arith.constant 0.000000e+00 : f32
    %39 = vector.broadcast %cst_23 : f32 to vector<8x128xf32>
    %c127_i32_24 = arith.constant 127 : i32
    %40 = tpu.dynamic_rotate %31 by %c127_i32_24 dim 1 : vector<8x128xf32>, i32 -> vector<8x128xf32>
    %41 = arith.select %38, %39, %40 : vector<8x128xi1>, vector<8x128xf32>
    %42 = tpu.concatenate %36, %31, %41 in 0 : vector<8x128xf32>, vector<8x128xf32>, vector<8x128xf32> -> vector<24x128xf32>
    %cst_25 = arith.constant dense<0.000000e+00> : vector<8x128xf32>
    %43 = tpu.matmul %2, %42, %cst_25 {dimension_numbers = #tpu.dot_dimension_numbers<[1], [0], [0], [1], [0, 0, 1, 1], [], []>} : vector<8x24xf32>, vector<24x128xf32>, vector<8x128xf32> -> vector<8x128xf32>
    %44 = vector.broadcast %4 : vector<8x1xf32> to vector<8x128xf32>
    %45 = arith.addf %43, %44 : vector<8x128xf32>
    %cst_26 = arith.constant 0.000000e+00 : f32
    %46 = vector.broadcast %cst_26 : f32 to vector<8x128xf32>
    %47 = arith.cmpf ogt, %45, %46 : vector<8x128xf32>
    %48 = vector.broadcast %6 : vector<8x1xf32> to vector<8x128xf32>
    %49 = arith.mulf %48, %45 : vector<8x128xf32>
    %50 = arith.select %47, %45, %49 : vector<8x128xi1>, vector<8x128xf32>
    %51 = arith.addf %50, %8 : vector<8x128xf32>
    %c0_27 = arith.constant 0 : index
    %c0_28 = arith.constant 0 : index
    %c0_29 = arith.constant 0 : index
    %52 = vector.load %arg8[%c0_27, %c0_28, %c0_29] : memref<1x8x128xf32, #tpu.memory_space<vmem>>, vector<1x8x128xf32>
    %53 = vector.shape_cast %52 : vector<1x8x128xf32> to vector<8x128xf32>
    %54 = vector.shape_cast %51 : vector<8x128xf32> to vector<1x8x128xf32>
    tpu.vector_store %arg8[%c0_27, %c0_28, %c0_29], %54 {strides = array<i32>} : memref<1x8x128xf32, #tpu.memory_space<vmem>>, vector<1x8x128xf32>,
    return
  }
  func.func @transform_0(%arg0: i32) -> (i32, i32, i32) {
    %c0_i32 = arith.constant 0 : i32
    %c0_i32_0 = arith.constant 0 : i32
    %c0_i32_1 = arith.constant 0 : i32
    return %arg0, %c0_i32, %c0_i32_0 : i32, i32, i32
  }
  func.func @transform_1(%arg0: i32) -> (i32, i32) {
    %c0_i32 = arith.constant 0 : i32
    %c0_i32_0 = arith.constant 0 : i32
    %c0_i32_1 = arith.constant 0 : i32
    return %c0_i32, %c0_i32_0 : i32, i32
  }
  func.func @transform_2(%arg0: i32) -> (i32, i32) {
    %c0_i32 = arith.constant 0 : i32
    %c0_i32_0 = arith.constant 0 : i32
    %c0_i32_1 = arith.constant 0 : i32
    return %c0_i32, %c0_i32_0 : i32, i32
  }
  func.func @transform_3(%arg0: i32) -> (i32, i32) {
    %c0_i32 = arith.constant 0 : i32
    %c0_i32_0 = arith.constant 0 : i32
    %c0_i32_1 = arith.constant 0 : i32
    return %c0_i32, %c0_i32_0 : i32, i32
  }
  func.func @transform_4(%arg0: i32) -> (i32, i32) {
    %c0_i32 = arith.constant 0 : i32
    %c0_i32_0 = arith.constant 0 : i32
    %c0_i32_1 = arith.constant 0 : i32
    return %c0_i32, %c0_i32_0 : i32, i32
  }
  func.func @transform_5(%arg0: i32) -> (i32, i32) {
    %c0_i32 = arith.constant 0 : i32
    %c0_i32_0 = arith.constant 0 : i32
    %c0_i32_1 = arith.constant 0 : i32
    return %c0_i32, %c0_i32_0 : i32, i32
  }
  func.func @transform_6(%arg0: i32) -> (i32, i32) {
    %c0_i32 = arith.constant 0 : i32
    %c0_i32_0 = arith.constant 0 : i32
    %c0_i32_1 = arith.constant 0 : i32
    return %c0_i32, %c0_i32_0 : i32, i32
  }
  func.func @transform_7(%arg0: i32) -> (i32, i32, i32) {
    %c0_i32 = arith.constant 0 : i32
    %c0_i32_0 = arith.constant 0 : i32
    %c0_i32_1 = arith.constant 0 : i32
    return %arg0, %c0_i32, %c0_i32_0 : i32, i32, i32
  }
}

</mosaic_0001>

<llo_original>
// kernel: tpu_custom_call.1
$region0: #{tpu_custom_call.1}
  #allocation0 [shape = 'u32[]', space=smem, size = 0x4, offset = 0x4, fixed_abs, tag = 'smem constant byte address 0x4 - core index']
  #allocation1 [shape = 'u32[144,128]{1,0:T(1,128)}', space=vmem, size = 0x12000, scoped, tag = 'internal scratch']
  %s0 = inlined_call_operand.vmem [shape: f32[2,8,128], index: 0, kind: input, shape index: {}]
  %s1 = inlined_call_operand.vmem [shape: f32[8,24], index: 1, kind: input, shape index: {}]
  %s2 = inlined_call_operand.vmem [shape: f32[8,1], index: 2, kind: input, shape index: {}]
  %s3 = inlined_call_operand.vmem [shape: f32[8,1], index: 3, kind: input, shape index: {}]
  %s4 = inlined_call_operand.vmem [shape: f32[8,24], index: 4, kind: input, shape index: {}]
  %s5 = inlined_call_operand.vmem [shape: f32[8,1], index: 5, kind: input, shape index: {}]
  %s6 = inlined_call_operand.vmem [shape: f32[8,1], index: 6, kind: input, shape index: {}]
  %s7 = inlined_call_operand.hbm [shape: f32[2,8,128], index: 7, kind: output, shape index: {}]
  %s8 = sld [smem:[#allocation0]]
  $region61: #{tpu_custom_call.1} parent=0
    _
  %s10 = ssub.s32 1, %s8
  %s11 = scalar_select 0, %s10, %s8
  $region1: #{tpu_custom_call.1} parent=0
    #allocation2 [shape = 'u8[8192]{0}', space=vmem, size = 0x2000, scoped, tag = 'output window, operand 0']
    #allocation3 [shape = 's32[2]{0}', space=sflag, size = 0x8, scoped, tag = 'scoped memory for tpu_custom_call.1']
    %12 = vsyncpa [#allocation3], 0
    %s13 = scalar_lea.sflag [#allocation3], 1
    %14 = vsyncpa %s13, 0
    loop: start=0, step=1, limit=4
    $region2: #{tpu_custom_call.1} parent=1 // loop_pre_header
      _
    $region3: #{tpu_custom_call.1} parent=1 // loop_header
      %s16 = sphi 0, %s20
      %p17 = scmp.ge.s32.totalorder %s16, 4
      %s26 = sphi 0, %s28
      %s29 = sphi 0, %s26
      %s30 = sphi 0, %s29
      %s46 = sphi 0, %s30
      %s50 = sphi 0, %s50
      %s52 = sphi 0, %s50
      %s53 = sphi 0, %s52
      %s67 = sphi 0, %s53
      %s71 = sphi 0, %s71
      %s73 = sphi 0, %s71
      %s74 = sphi 0, %s73
      %s88 = sphi 0, %s74
      %s92 = sphi 0, %s92
      %s94 = sphi 0, %s92
      %s95 = sphi 0, %s94
      %s109 = sphi 0, %s95
      %s113 = sphi 0, %s113
      %s115 = sphi 0, %s113
      %s116 = sphi 0, %s115
      %s130 = sphi 0, %s116
      %s134 = sphi 0, %s134
      %s136 = sphi 0, %s134
      %s137 = sphi 0, %s136
      %s151 = sphi 0, %s137
      %s155 = sphi 0, %s155
      %s157 = sphi 0, %s155
      %s158 = sphi 0, %s157
      %s172 = sphi 0, %s158
      %s178 = sphi 0, %s180
      %s181 = sphi 0, %s178
      %s182 = sphi 0, %s181
      %s198 = sphi 0, %s182
    $region4: #{tpu_custom_call.1} parent=1 // loop_header_branch
      %19 = sbr.rel (%p17) target = $region8
    $region5: #{tpu_custom_call.1} parent=1 // loop_body
      %s21 = ssub.s32 %s16, 1
      %s22 = ssub.s32 %s16, 2
      %s23 = sadd.s32 %s16, 1
      %s24 = ssub.s32 %s16, %s23
      %p25 = scmp.eq.s32.totalorder %s24, 0
      %s27 = sadd.s32 %s26, 1
      %s28 = scalar_select %p25, %s26, %s27
      %p31 = pneg %p25
      %p32 = scmp.eq.s32.totalorder %s16, 1
      %p33 = por %p31, %p32
      %p34 = scmp.ne.s32.totalorder %s26, %s29
      %p35 = scmp.eq.s32.totalorder %s16, 0
      %p36 = por %p34, %p35
      %p37 = scmp.ne.s32.totalorder %s26, %s29
      %p38 = scmp.eq.s32.totalorder %s21, 1
      %p39 = por %p37, %p38
      %p40 = scmp.ne.s32.totalorder %s29, %s30
      %p41 = scmp.eq.s32.totalorder %s21, 0
      %p42 = por %p40, %p41
      %p43 = scmp.ne.s32.totalorder %s29, %s30
      %p44 = scmp.eq.s32.totalorder %s22, 1
      %p45 = por %p43, %p44
      %p47 = scmp.ne.s32.totalorder %s30, %s46
      %p48 = scmp.eq.s32.totalorder %s22, 0
      %p49 = por %p47, %p48
      %s51 = sadd.s32 %s50, 1
      %p54 = scmp.eq.s32.totalorder %s16, 1
      %p55 = scmp.ne.s32.totalorder %s50, %s52
      %p56 = scmp.eq.s32.totalorder %s16, 0
      %p57 = por %p55, %p56
      %p58 = scmp.ne.s32.totalorder %s50, %s52
      %p59 = scmp.eq.s32.totalorder %s21, 1
      %p60 = por %p58, %p59
      %p61 = scmp.ne.s32.totalorder %s52, %s53
      %p62 = scmp.eq.s32.totalorder %s21, 0
      %p63 = por %p61, %p62
      %p64 = scmp.ne.s32.totalorder %s52, %s53
      %p65 = scmp.eq.s32.totalorder %s22, 1
      %p66 = por %p64, %p65
      %p68 = scmp.ne.s32.totalorder %s53, %s67
      %p69 = scmp.eq.s32.totalorder %s22, 0
      %p70 = por %p68, %p69
      %s72 = sadd.s32 %s71, 1
      %p75 = scmp.eq.s32.totalorder %s16, 1
      %p76 = scmp.ne.s32.totalorder %s71, %s73
      %p77 = scmp.eq.s32.totalorder %s16, 0
      %p78 = por %p76, %p77
      %p79 = scmp.ne.s32.totalorder %s71, %s73
      %p80 = scmp.eq.s32.totalorder %s21, 1
      %p81 = por %p79, %p80
      %p82 = scmp.ne.s32.totalorder %s73, %s74
      %p83 = scmp.eq.s32.totalorder %s21, 0
      %p84 = por %p82, %p83
      %p85 = scmp.ne.s32.totalorder %s73, %s74
      %p86 = scmp.eq.s32.totalorder %s22, 1
      %p87 = por %p85, %p86
      %p89 = scmp.ne.s32.totalorder %s74, %s88
      %p90 = scmp.eq.s32.totalorder %s22, 0
      %p91 = por %p89, %p90
      %s93 = sadd.s32 %s92, 1
      %p96 = scmp.eq.s32.totalorder %s16, 1
      %p97 = scmp.ne.s32.totalorder %s92, %s94
      %p98 = scmp.eq.s32.totalorder %s16, 0
      %p99 = por %p97, %p98
      %p100 = scmp.ne.s32.totalorder %s92, %s94
      %p101 = scmp.eq.s32.totalorder %s21, 1
      %p102 = por %p100, %p101
      %p103 = scmp.ne.s32.totalorder %s94, %s95
      %p104 = scmp.eq.s32.totalorder %s21, 0
      %p105 = por %p103, %p104
      %p106 = scmp.ne.s32.totalorder %s94, %s95
      %p107 = scmp.eq.s32.totalorder %s22, 1
      %p108 = por %p106, %p107
      %p110 = scmp.ne.s32.totalorder %s95, %s109
      %p111 = scmp.eq.s32.totalorder %s22, 0
      %p112 = por %p110, %p111
      %s114 = sadd.s32 %s113, 1
      %p117 = scmp.eq.s32.totalorder %s16, 1
      %p118 = scmp.ne.s32.totalorder %s113, %s115
      %p119 = scmp.eq.s32.totalorder %s16, 0
      %p120 = por %p118, %p119
      %p121 = scmp.ne.s32.totalorder %s113, %s115
      %p122 = scmp.eq.s32.totalorder %s21, 1
      %p123 = por %p121, %p122
      %p124 = scmp.ne.s32.totalorder %s115, %s116
      %p125 = scmp.eq.s32.totalorder %s21, 0
      %p126 = por %p124, %p125
      %p127 = scmp.ne.s32.totalorder %s115, %s116
      %p128 = scmp.eq.s32.totalorder %s22, 1
      %p129 = por %p127, %p128
      %p131 = scmp.ne.s32.totalorder %s116, %s130
      %p132 = scmp.eq.s32.totalorder %s22, 0
      %p133 = por %p131, %p132
      %s135 = sadd.s32 %s134, 1
      %p138 = scmp.eq.s32.totalorder %s16, 1
      %p139 = scmp.ne.s32.totalorder %s134, %s136
      %p140 = scmp.eq.s32.totalorder %s16, 0
      %p141 = por %p139, %p140
      %p142 = scmp.ne.s32.totalorder %s134, %s136
      %p143 = scmp.eq.s32.totalorder %s21, 1
      %p144 = por %p142, %p143
      %p145 = scmp.ne.s32.totalorder %s136, %s137
      %p146 = scmp.eq.s32.totalorder %s21, 0
      %p147 = por %p145, %p146
      %p148 = scmp.ne.s32.totalorder %s136, %s137
      %p149 = scmp.eq.s32.totalorder %s22, 1
      %p150 = por %p148, %p149
      %p152 = scmp.ne.s32.totalorder %s137, %s151
      %p153 = scmp.eq.s32.totalorder %s22, 0
      %p154 = por %p152, %p153
      %s156 = sadd.s32 %s155, 1
      %p159 = scmp.eq.s32.totalorder %s16, 1
      %p160 = scmp.ne.s32.totalorder %s155, %s157
      %p161 = scmp.eq.s32.totalorder %s16, 0
      %p162 = por %p160, %p161
      %p163 = scmp.ne.s32.totalorder %s155, %s157
      %p164 = scmp.eq.s32.totalorder %s21, 1
      %p165 = por %p163, %p164
      %p166 = scmp.ne.s32.totalorder %s157, %s158
      %p167 = scmp.eq.s32.totalorder %s21, 0
      %p168 = por %p166, %p167
      %p169 = scmp.ne.s32.totalorder %s157, %s158
      %p170 = scmp.eq.s32.totalorder %s22, 1
      %p171 = por %p169, %p170
      %p173 = scmp.ne.s32.totalorder %s158, %s172
      %p174 = scmp.eq.s32.totalorder %s22, 0
      %p175 = por %p173, %p174
      %s176 = ssub.s32 %s16, %s23
      %p177 = scmp.eq.s32.totalorder %s176, 0
      %s179 = sadd.s32 %s178, 1
      %s180 = scalar_select %p177, %s178, %s179
      %p183 = pneg %p177
      %p184 = scmp.eq.s32.totalorder %s16, 1
      %p185 = por %p183, %p184
      %p186 = scmp.ne.s32.totalorder %s178, %s181
      %p187 = scmp.eq.s32.totalorder %s16, 0
      %p188 = por %p186, %p187
      %p189 = scmp.ne.s32.totalorder %s178, %s181
      %p190 = scmp.eq.s32.totalorder %s21, 1
      %p191 = por %p189, %p190
      %p192 = scmp.ne.s32.totalorder %s181, %s182
      %p193 = scmp.eq.s32.totalorder %s21, 0
      %p194 = por %p192, %p193
      %p195 = scmp.ne.s32.totalorder %s181, %s182
      %p196 = scmp.eq.s32.totalorder %s22, 1
      %p197 = por %p195, %p196
      %p199 = scmp.ne.s32.totalorder %s182, %s198
      %p200 = scmp.eq.s32.totalorder %s22, 0
      %p201 = por %p199, %p200
      %p202 = scmp.le.s32.totalorder 1, %s16
      %p203 = scmp.lt.s32.totalorder %s16, 3
      %p204 = pnand %p202, %p203
      %p205 = pneg %p204
      // Predicated region
      $region9: #{tpu_custom_call.1} parent=5 // pred_check
        _
      $region10: #{tpu_custom_call.1} parent=5 // pred_check_branch
        %207 = sbr.rel (%p204) target = $region12
      $region11: #{tpu_custom_call.1} parent=5 // pred_region
        %s208 = ssub.s32 %s16, 1
        // Predicated region
        $region13: #{tpu_custom_call.1} parent=11 // pred_check
          %p209 = pneg %p63
        $region14: #{tpu_custom_call.1} parent=11 // pred_check_branch
          %211 = sbr.rel (%p209) target = $region16
        $region15: #{tpu_custom_call.1} parent=11 // pred_region
          _
        $region16: #{tpu_custom_call.1} parent=11 // pred_fallthru
          _
        // Predicated region
        $region17: #{tpu_custom_call.1} parent=11 // pred_check
          %p212 = pneg %p84
        $region18: #{tpu_custom_call.1} parent=11 // pred_check_branch
          %214 = sbr.rel (%p212) target = $region20
        $region19: #{tpu_custom_call.1} parent=11 // pred_region
          _
        $region20: #{tpu_custom_call.1} parent=11 // pred_fallthru
          _
        // Predicated region
        $region21: #{tpu_custom_call.1} parent=11 // pred_check
          %p215 = pneg %p105
        $region22: #{tpu_custom_call.1} parent=11 // pred_check_branch
          %217 = sbr.rel (%p215) target = $region24
        $region23: #{tpu_custom_call.1} parent=11 // pred_region
          _
        $region24: #{tpu_custom_call.1} parent=11 // pred_fallthru
          _
        // Predicated region
        $region25: #{tpu_custom_call.1} parent=11 // pred_check
          %p218 = pneg %p126
        $region26: #{tpu_custom_call.1} parent=11 // pred_check_branch
          %220 = sbr.rel (%p218) target = $region28
        $region27: #{tpu_custom_call.1} parent=11 // pred_region
          _
        $region28: #{tpu_custom_call.1} parent=11 // pred_fallthru
          _
        // Predicated region
        $region29: #{tpu_custom_call.1} parent=11 // pred_check
          %p221 = pneg %p147
        $region30: #{tpu_custom_call.1} parent=11 // pred_check_branch
          %223 = sbr.rel (%p221) target = $region32
        $region31: #{tpu_custom_call.1} parent=11 // pred_region
          _
        $region32: #{tpu_custom_call.1} parent=11 // pred_fallthru
          _
        // Predicated region
        $region33: #{tpu_custom_call.1} parent=11 // pred_check
          %p224 = pneg %p168
        $region34: #{tpu_custom_call.1} parent=11 // pred_check_branch
          %226 = sbr.rel (%p224) target = $region36
        $region35: #{tpu_custom_call.1} parent=11 // pred_region
          _
        $region36: #{tpu_custom_call.1} parent=11 // pred_fallthru
          _
      $region12: #{tpu_custom_call.1} parent=5 // pred_fallthru
        _
      %p227 = scmp.lt.s32.totalorder %s16, 2
      // Predicated region
      $region37: #{tpu_custom_call.1} parent=5 // pred_check
        %p228 = pneg %p227
      $region38: #{tpu_custom_call.1} parent=5 // pred_check_branch
        %230 = sbr.rel (%p228) target = $region40
      $region39: #{tpu_custom_call.1} parent=5 // pred_region
        // Predicated region
        $region41: #{tpu_custom_call.1} parent=39 // pred_check
          %p231 = pneg %p36
        $region42: #{tpu_custom_call.1} parent=39 // pred_check_branch
          %233 = sbr.rel (%p231) target = $region44
        $region43: #{tpu_custom_call.1} parent=39 // pred_region
          %p234 = scmp.lt.s32.totalorder %s16, 1
          %s235 = scalar_select %p234, %s16, 1
          %s236 = smul.addr %s235, 8
          %s237 = scalar_lea.vmem %s0, %s236
        $region44: #{tpu_custom_call.1} parent=39 // pred_fallthru
          _
      $region40: #{tpu_custom_call.1} parent=5 // pred_fallthru
        _
      %p238 = scmp.le.s32.totalorder 1, %s16
      %p239 = scmp.lt.s32.totalorder %s16, 3
      %p240 = pnand %p238, %p239
      %p241 = pneg %p240
      // Predicated region
      $region45: #{tpu_custom_call.1} parent=5 // pred_check
        _
      $region46: #{tpu_custom_call.1} parent=5 // pred_check_branch
        %243 = sbr.rel (%p240) target = $region48
      $region47: #{tpu_custom_call.1} parent=5 // pred_region
        %s244 = ssub.s32 %s16, 1
        %p245 = scmp.lt.s32.totalorder %s21, 1
        %s246 = scalar_select %p245, %s21, 1
        %s247 = smul.addr %s246, 8
        %s248 = scalar_lea.vmem %s0, %s247
        %p249 = pneg %p42
        %p250 = pneg %p39
        %p251 = pneg %p63
        %p252 = pneg %p60
        %p253 = pneg %p84
        %p254 = pneg %p81
        %p255 = pneg %p105
        %p256 = pneg %p102
        %p257 = pneg %p126
        %p258 = pneg %p123
        %p259 = pneg %p147
        %p260 = pneg %p144
        %p261 = pneg %p168
        %p262 = pneg %p165
        %p263 = pneg %p194
        %p264 = pneg %p191
        %s265 = sand.u32 %s181, 1
        %s266 = scalar_lea.sflag [#allocation3], %s265
        %s267 = sand.u32 %s181, 1
        %s268 = smul.addr %s267, 8
        %s269 = scalar_lea.vmem [#allocation2], %s268
        %p270 = scmp.lt.s32.totalorder %s21, 1
        %s271 = scalar_select %p270, %s21, 1
        %s272 = smul.addr %s271, 8
        %s273 = scalar_lea.vmem %s0, %s272
        %v274 = vlaneseq
        %v275 = vand.u32 %v274, 127
        %v276 = vld [vmem:[%s1] sm:$0xff]
        %v277 = vld [vmem:[%s4] sm:$0xff]
        %v278 = vld [vmem:[%s2] sm:$0xff]
        %v279 = vld [vmem:[%s5] sm:$0xff]
        %v280 = vld [vmem:[%s3] sm:$0xff]
        %v281 = vld [vmem:[%s6] sm:$0xff]
        %v282 = vld [vmem:[%s273] sm:$0xff]
        %vm283 = vcmp.eq.s32.totalorder %v275, 0
        %284 = vrot.lane.b32.xlu0 %v282, 1
        %v285 = vpop.permute.xlu0 %284
        %v286 = vsel %vm283, 0.0, %v285
        %vm287 = vcmp.eq.s32.totalorder %v275, 127
        %288 = vrot.lane.b32.xlu0 %v282, 127
        %v289 = vpop.permute.xlu0 %288
        %v290 = vsel %vm287, 0.0, %v289
        %292 = vset.pattern.permute.xlu0 0
        %293 = vperm.xlu0 %292, %v278
        %v294 = vpop.permute.xlu0 %293
        %vm296 = vcmask 195584
        %v298 = vsel %vm296, %v276, 0
        %300 = vmatprep.subr.mxu0 0.0
        %301 = vmatpush1.msra.mxu0 %v286
        %302 = vmatprep.subr.mxu0 0.0
        %303 = vmatpush1.msra.mxu0 %v282
        %304 = vmatprep.subr.mxu0 0.0
        %305 = vmatpush1.msra.mxu0 %v290
        %306 = vmatprep.subr.mxu0 0.0
        %307 = vmatpush1.msra.mxu0 0.0
        %308 = vmatprep.subr.mxu0 0.0
        %309 = vmatpush1.msra.mxu0 0.0
        %310 = vmatprep.subr.mxu0 0.0
        %311 = vmatpush1.msra.mxu0 0.0
        %312 = vmatprep.subr.mxu0 0.0
        %313 = vmatpush1.msra.mxu0 0.0
        %314 = vmatprep.subr.mxu0 0.0
        %315 = vmatpush1.msra.mxu0 0.0
        %316 = vmatprep.subr.mxu0 0.0
        %317 = vmatpush1.msra.mxu0 0.0
        %318 = vmatprep.subr.mxu0 0.0
        %319 = vmatpush1.msra.mxu0 0.0
        %320 = vmatprep.subr.mxu0 0.0
        %321 = vmatpush1.msra.mxu0 0.0
        %322 = vmatprep.subr.mxu0 0.0
        %323 = vmatpush1.msra.mxu0 0.0
        %324 = vmatprep.subr.mxu0 0.0
        %325 = vmatpush1.msra.mxu0 0.0
        %326 = vmatprep.subr.mxu0 0.0
        %327 = vmatpush1.msra.mxu0 0.0
        %328 = vmatprep.subr.mxu0 0.0
        %329 = vmatpush1.msra.mxu0 0.0
        %330 = vmatprep.subr.mxu0 0.0
        %331 = vmatpush1.msra.mxu0 0.0
        %332 = vmatprep.subr.mxu0 0.0
        %333 = vmatpush1.msra.mxu0 0.0
        %334 = vmatprep.subr.mxu0 0.0
        %335 = vmatpush1.msra.mxu0 0.0
        %336 = vmatprep.subr.mxu0 0.0
        %337 = vmatpush1.msra.mxu0 0.0
        %338 = vmatprep.subr.mxu0 0.0
        %339 = vmatpush1.msra.mxu0 0.0
        %340 = vmatprep.subr.mxu0 0.0
        %341 = vmatpush1.msra.mxu0 0.0
        %342 = vmatprep.subr.mxu0 0.0
        %343 = vmatpush1.msra.mxu0 0.0
        %344 = vmatprep.subr.mxu0 0.0
        %345 = vmatpush1.msra.mxu0 0.0
        %346 = vmatprep.subr.mxu0 0.0
        %347 = vmatpush1.msra.mxu0 0.0
        %348 = vmatprep.subr.mxu0 0.0
        %349 = vmatpush1.msra.mxu0 0.0
        %350 = vmatprep.subr.mxu0 0.0
        %351 = vmatpush1.msra.mxu0 0.0
        %352 = vmatprep.subr.mxu0 0.0
        %353 = vmatpush1.msra.mxu0 0.0
        %354 = vmatprep.subr.mxu0 0.0
        %355 = vmatpush1.msra.mxu0 0.0
        %356 = vmatprep.subr.mxu0 0.0
        %357 = vmatpush1.msra.mxu0 0.0
        %358 = vmatprep.subr.mxu0 0.0
        %359 = vmatpush1.msra.mxu0 0.0
        %360 = vmatprep.subr.mxu0 0.0
        %361 = vmatpush1.msra.mxu0 0.0
        %362 = vmatprep.subr.mxu0 0.0
        %363 = vmatpush1.msra.mxu0 0.0
        %364 = vmatprep.mubr.f32.mxu0 0.0
        %365 = vmatmul.mubr.f32.gmra.mrb[0].mxu0 %v298
        %v366 = vpop.f32.mrb[0].mxu0
        %v367 = vadd.f32 %v294, %v366
        %v368 = vpop.f32.mrb[0].mxu0
        %369 = vdwg.mxu0
        %vm370 = vcmp.gt.f32.partialorder %v367, 0.0
        %372 = vset.pattern.permute.xlu0 0
        %373 = vperm.xlu0 %372, %v280
        %v374 = vpop.permute.xlu0 %373
        %v376 = vmul.f32 %v374, %v367
        %v377 = vsel %vm370, %v367, %v376
        %vm378 = vcmp.lt.s32.totalorder %v275, 16
        %v379 = vsel %vm378, %v377, 0.0
        %380 = vrot.lane.b32.xlu0 %v379, 1
        %v381 = vpop.permute.xlu0 %380
        %v382 = vsel %vm283, 0.0, %v381
        %383 = vrot.lane.b32.xlu0 %v379, 127
        %v384 = vpop.permute.xlu0 %383
        %v385 = vsel %vm287, 0.0, %v384
        %387 = vset.pattern.permute.xlu0 0
        %388 = vperm.xlu0 %387, %v279
        %v389 = vpop.permute.xlu0 %388
        %v392 = vsel %vm296, %v277, 0
        %394 = vmatprep.subr.mxu0 0.0
        %395 = vmatpush1.msra.mxu0 %v382
        %396 = vmatprep.subr.mxu0 0.0
        %397 = vmatpush1.msra.mxu0 %v379
        %398 = vmatprep.subr.mxu0 0.0
        %399 = vmatpush1.msra.mxu0 %v385
        %400 = vmatprep.subr.mxu0 0.0
        %401 = vmatpush1.msra.mxu0 0.0
        %402 = vmatprep.subr.mxu0 0.0
        %403 = vmatpush1.msra.mxu0 0.0
        %404 = vmatprep.subr.mxu0 0.0
        %405 = vmatpush1.msra.mxu0 0.0
        %406 = vmatprep.subr.mxu0 0.0
        %407 = vmatpush1.msra.mxu0 0.0
        %408 = vmatprep.subr.mxu0 0.0
        %409 = vmatpush1.msra.mxu0 0.0
        %410 = vmatprep.subr.mxu0 0.0
        %411 = vmatpush1.msra.mxu0 0.0
        %412 = vmatprep.subr.mxu0 0.0
        %413 = vmatpush1.msra.mxu0 0.0
        %414 = vmatprep.subr.mxu0 0.0
        %415 = vmatpush1.msra.mxu0 0.0
        %416 = vmatprep.subr.mxu0 0.0
        %417 = vmatpush1.msra.mxu0 0.0
        %418 = vmatprep.subr.mxu0 0.0
        %419 = vmatpush1.msra.mxu0 0.0
        %420 = vmatprep.subr.mxu0 0.0
        %421 = vmatpush1.msra.mxu0 0.0
        %422 = vmatprep.subr.mxu0 0.0
        %423 = vmatpush1.msra.mxu0 0.0
        %424 = vmatprep.subr.mxu0 0.0
        %425 = vmatpush1.msra.mxu0 0.0
        %426 = vmatprep.subr.mxu0 0.0
        %427 = vmatpush1.msra.mxu0 0.0
        %428 = vmatprep.subr.mxu0 0.0
        %429 = vmatpush1.msra.mxu0 0.0
        %430 = vmatprep.subr.mxu0 0.0
        %431 = vmatpush1.msra.mxu0 0.0
        %432 = vmatprep.subr.mxu0 0.0
        %433 = vmatpush1.msra.mxu0 0.0
        %434 = vmatprep.subr.mxu0 0.0
        %435 = vmatpush1.msra.mxu0 0.0
        %436 = vmatprep.subr.mxu0 0.0
        %437 = vmatpush1.msra.mxu0 0.0
        %438 = vmatprep.subr.mxu0 0.0
        %439 = vmatpush1.msra.mxu0 0.0
        %440 = vmatprep.subr.mxu0 0.0
        %441 = vmatpush1.msra.mxu0 0.0
        %442 = vmatprep.subr.mxu0 0.0
        %443 = vmatpush1.msra.mxu0 0.0
        %444 = vmatprep.subr.mxu0 0.0
        %445 = vmatpush1.msra.mxu0 0.0
        %446 = vmatprep.subr.mxu0 0.0
        %447 = vmatpush1.msra.mxu0 0.0
        %448 = vmatprep.subr.mxu0 0.0
        %449 = vmatpush1.msra.mxu0 0.0
        %450 = vmatprep.subr.mxu0 0.0
        %451 = vmatpush1.msra.mxu0 0.0
        %452 = vmatprep.subr.mxu0 0.0
        %453 = vmatpush1.msra.mxu0 0.0
        %454 = vmatprep.subr.mxu0 0.0
        %455 = vmatpush1.msra.mxu0 0.0
        %456 = vmatprep.subr.mxu0 0.0
        %457 = vmatpush1.msra.mxu0 0.0
        %458 = vmatprep.mubr.f32.mxu0 0.0
        %459 = vmatmul.mubr.f32.gmra.mrb[0].mxu0 %v392
        %v460 = vpop.f32.mrb[0].mxu0
        %v461 = vadd.f32 %v389, %v460
        %v462 = vpop.f32.mrb[0].mxu0
        %463 = vdwg.mxu0
        %vm464 = vcmp.gt.f32.partialorder %v461, 0.0
        %466 = vset.pattern.permute.xlu0 0
        %467 = vperm.xlu0 %466, %v281
        %v468 = vpop.permute.xlu0 %467
        %v470 = vmul.f32 %v468, %v461
        %v471 = vsel %vm464, %v461, %v470
        %v472 = vadd.f32 %v471, %v282
        %473 = vst [vmem:[%s269] sm:$0xff] %v472
        %s474 = sand.u32 %s181, 1
        %s475 = scalar_lea.sflag [#allocation3], %s474
        %s476 = sand.u32 %s181, 1
        %s477 = smul.addr %s476, 8
        %s478 = scalar_lea.vmem [#allocation2], %s477
        // Predicated region
        $region49: #{tpu_custom_call.1} parent=47 // pred_check
          %p479 = pneg %p191
        $region50: #{tpu_custom_call.1} parent=47 // pred_check_branch
          %481 = sbr.rel (%p479) target = $region52
        $region51: #{tpu_custom_call.1} parent=47 // pred_region
          %s483 = ssub.s32 128, 128
          %484 = vsyncadd %s475, %s483
          %s485 = smul.addr %s21, 128
          %s486 = scalar_lea.hbm %s7, %s485
          %s488 = sshll.u32 %s478, 4
          %s489 = int_to_ptr.vmem [resolvable:$true] %s488
          %491 = dma.vmem_to_hbm [thread:$0]  %s489, 128, %s486, %s475
        $region52: #{tpu_custom_call.1} parent=47 // pred_fallthru
          _
      $region48: #{tpu_custom_call.1} parent=5 // pred_fallthru
        _
      %p492 = scmp.le.s32.totalorder 2, %s16
      // Predicated region
      $region53: #{tpu_custom_call.1} parent=5 // pred_check
        %p493 = pneg %p492
      $region54: #{tpu_custom_call.1} parent=5 // pred_check_branch
        %495 = sbr.rel (%p493) target = $region56
      $region55: #{tpu_custom_call.1} parent=5 // pred_region
        %s496 = ssub.s32 %s16, 2
        // Predicated region
        $region57: #{tpu_custom_call.1} parent=55 // pred_check
          %p497 = pneg %p197
        $region58: #{tpu_custom_call.1} parent=55 // pred_check_branch
          %499 = sbr.rel (%p497) target = $region60
        $region59: #{tpu_custom_call.1} parent=55 // pred_region
          %s500 = sand.u32 %s182, 1
          %s501 = scalar_lea.sflag [#allocation3], %s500
          %s502 = sand.u32 %s182, 1
          %s503 = smul.addr %s502, 8
          %s504 = scalar_lea.vmem [#allocation2], %s503
          %505 = dma.done %s501, 128
        $region60: #{tpu_custom_call.1} parent=55 // pred_fallthru
          _
      $region56: #{tpu_custom_call.1} parent=5 // pred_fallthru
        _
    $region6: #{tpu_custom_call.1} parent=1 // loop_footer
      %s20 = sadd.s32 1, %s16
    $region7: #{tpu_custom_call.1} parent=1 // loop_footer_branch
      %15 = sbr.rel target = $region3
    $region8: #{tpu_custom_call.1} parent=1 // loop_exit
      _
    %506 = vsyncpa [#allocation3], 1
    %s507 = scalar_lea.sflag [#allocation3], 1
    %508 = vsyncpa %s507, 1

</llo_original>
